<compile_context>
chip_gen: v7x
topology: tpu7x:2x2x1
jax: 0.10.0
libtpu: 0.0.40
codegen_flags: <defaults>
</compile_context>

<pallas_src>
import functools

import jax
import jax.numpy as jnp
from jax.experimental import pallas as pl
from jax.experimental.pallas import tpu as pltpu


def _linear_ln_relu_finalize(h, b_ref, gamma_ref, beta_ref, o_ref, eps, valid_out):
    """h: (tm, out_pad) f32 matmul result (pre-bias).  Writes LN(ReLU) to o_ref.

    Invariant: padded columns of W^T, bias, gamma and beta are exactly zero, so
    sums over the full padded feature axis equal sums over the valid columns.
    """
    h = h + b_ref[...].astype(jnp.float32)
    inv_n = jnp.float32(1.0 / valid_out)
    u = jnp.sum(h, axis=-1, keepdims=True) * inv_n
    # Biased variance via E[h^2] - mean^2 (no per-element mask); clamp >= 0.
    s = jnp.sum(h * h, axis=-1, keepdims=True) * inv_n - u * u
    s = jnp.maximum(s, jnp.float32(0.0))
    inv_std = jax.lax.rsqrt(s + jnp.float32(eps))            # EUP slot
    scale = gamma_ref[...].astype(jnp.float32) * inv_std     # gamma folded in
    hn = (h - u) * scale + beta_ref[...].astype(jnp.float32)
    # ReLU; padded columns have gamma = beta = 0 -> output 0 (sliced off outside).
    o_ref[...] = jnp.maximum(hn, jnp.float32(0.0)).astype(o_ref.dtype)


def _mlp_vectornet_kernel(x_ref, w_ref, b_ref, gamma_ref, beta_ref, o_ref, *,
                          eps, valid_out, precision):
    # Single K block: W^T fully resident (single-buffered).
    h = jnp.dot(x_ref[...], w_ref[...],
                preferred_element_type=jnp.float32, precision=precision)
    _linear_ln_relu_finalize(h, b_ref, gamma_ref, beta_ref, o_ref, eps, valid_out)


def _mlp_vectornet_kernel_ktiled(x_ref, w_ref, b_ref, gamma_ref, beta_ref, o_ref,
                                 acc_ref, *, eps, valid_out, precision):
    # K-tiled reduction: accumulate into f32 scratch, finalize on last K step.
    k = pl.program_id(1)

    @pl.when(k == 0)
    def _():
        acc_ref[...] = jnp.zeros_like(acc_ref)

    acc_ref[...] += jnp.dot(x_ref[...], w_ref[...],
                            preferred_element_type=jnp.float32,
                            precision=precision)

    @pl.when(k == pl.num_programs(1) - 1)
    def _():
        _linear_ln_relu_finalize(acc_ref[...], b_ref, gamma_ref, beta_ref,
                                 o_ref, eps, valid_out)


def mlp_vectornet(hidden_states, w, b, gamma, beta, *, eps=1e-5,
                  compute_dtype=None, precision=None, tile_rows=None,
                  return_lane_padded=False):
    """Fused Linear -> LayerNorm -> ReLU.

    hidden_states: (..., hidden); w: (out, hidden) PyTorch-style; b/gamma/beta: (out,).
    compute_dtype: optionally cast x / W (e.g. jnp.bfloat16) for MXU throughput.
    precision: pass jax.lax.Precision.HIGHEST for f32 bit-parity with PyTorch.
    """
    *lead, hidden = hidden_states.shape
    out_features = w.shape[0]
    out_dtype = hidden_states.dtype

    x2d = hidden_states.reshape(-1, hidden)
    w_t = w.T  # (hidden, out)
    if compute_dtype is not None:
        x2d = x2d.astype(compute_dtype)
        w_t = w_t.astype(compute_dtype)
    n_rows = x2d.shape[0]

    # --- Lane-dense output: pad parameters (only) on the out axis to x128. ---
    # NOTE: padded columns MUST be exactly zero (variance / mean math relies on it).
    out_pad = ((out_features + 127) // 128) * 128
    if out_pad != out_features:
        pad = out_pad - out_features
        w_t = jnp.pad(w_t, ((0, 0), (0, pad)))
        b = jnp.pad(b, (0, pad))
        gamma = jnp.pad(gamma, (0, pad))
        beta = jnp.pad(beta, (0, pad))
    b2 = b.reshape(1, out_pad)
    g2 = gamma.reshape(1, out_pad)
    beta2 = beta.reshape(1, out_pad)

    itemsize_x = jnp.dtype(x2d.dtype).itemsize
    itemsize_w = jnp.dtype(w_t.dtype).itemsize
    itemsize_o = jnp.dtype(out_dtype).itemsize

    # --- Chip-aware VMEM budget. ---
    try:
        vmem_cap = int(pltpu.get_tpu_info().vmem_capacity_bytes)
    except Exception:
        vmem_cap = 64 * 1024 * 1024  # conservative (v7x-sized) fallback
    budget = max(vmem_cap - 8 * 1024 * 1024, 8 * 1024 * 1024)

    # Dtype-aware row-tile floor (sub-32-bit dtypes pack along sublanes).
    min_rows = {4: 8, 2: 16, 1: 32}.get(itemsize_x, 8)
    rows_rounded = ((n_rows + min_rows - 1) // min_rows) * min_rows

    def _est_vmem(tm_, tk_, ktiled_):
        w_bufs = 2 if ktiled_ else 1           # streamed weight: default 2 bufs
        acc = tm_ * out_pad * 4 if ktiled_ else 0
        return (2 * tm_ * tk_ * itemsize_x     # x tiles (double-buffered)
                + w_bufs * tk_ * out_pad * itemsize_w
                + 2 * tm_ * out_pad * itemsize_o   # out tiles (double-buffered)
                + 3 * out_pad * 4                  # bias / gamma / beta (1 buf)
                + acc
                + 4 * tm_ * out_pad * 4)           # f32 LN temporaries headroom

    # --- Decide whether to K-tile the reduction (hidden) axis. ---
    base_tm = min(max(min_rows, 256), rows_rounded)
    ktiled = False
    tk = hidden
    hidden_pad = hidden
    if hidden > 128 and _est_vmem(base_tm, hidden, False) > budget:
        ktiled = True
        tk = ((hidden + 127) // 128) * 128
        while tk > 128 and _est_vmem(base_tm, tk, True) > budget:
            tk = ((tk // 2 + 127) // 128) * 128
        hidden_pad = ((hidden + tk - 1) // tk) * tk
        if hidden_pad // tk <= 1:              # degenerate: back to single block
            ktiled = False
            tk = hidden
            hidden_pad = hidden
    if hidden_pad != hidden:
        # Zero-pad K (doesn't change the matmul); only on the large-hidden path.
        x2d = jnp.pad(x2d, ((0, 0), (0, hidden_pad - hidden)))
        w_t = jnp.pad(w_t, ((0, hidden_pad - hidden), (0, 0)))

    # --- Row tile from the remaining VMEM budget (cap 1024, floor min_rows). ---
    w_bufs = 2 if ktiled else 1
    fixed = w_bufs * tk * out_pad * itemsize_w + 3 * out_pad * 4
    per_row = (2 * tk * itemsize_x + 2 * out_pad * itemsize_o
               + (out_pad * 4 if ktiled else 0) + 4 * out_pad * 4)
    if budget > fixed:
        tm_budget = max(min_rows, int((budget - fixed) // per_row))
    else:
        tm_budget = min_rows
    tm_cap = tile_rows if tile_rows is not None else 1024
    tm = min(tm_cap, tm_budget, rows_rounded)
    tm = max(min_rows, (tm // min_rows) * min_rows)

    # Keep >= 2 row grid steps when possible so both v7x TensorCores get work.
    if (n_rows + tm - 1) // tm == 1 and rows_rounded > min_rows:
        half = ((rows_rounded // 2 + min_rows - 1) // min_rows) * min_rows
        tm = max(min_rows, min(tm, half))

    grid_rows = (n_rows + tm - 1) // tm        # ragged last row block is OK

    # --- Always set the scoped VMEM limit, clamped to the chip's capacity. ---
    est = _est_vmem(tm, tk, ktiled)
    vmem_limit = int(min(max(int(est * 1.25), 16 * 1024 * 1024),
                         max(vmem_cap - 4 * 1024 * 1024, 16 * 1024 * 1024)))

    if not ktiled:
        kernel = functools.partial(_mlp_vectornet_kernel, eps=eps,
                                   valid_out=out_features, precision=precision)
        grid = (grid_rows,)
        in_specs = [
            pl.BlockSpec((tm, hidden), lambda i: (i, 0)),                  # x tile
            pl.BlockSpec((hidden, out_pad), lambda i: (0, 0),
                         pipeline_mode=pl.Buffered(1)),                    # W^T resident
            pl.BlockSpec((1, out_pad), lambda i: (0, 0),
                         pipeline_mode=pl.Buffered(1)),                    # bias
            pl.BlockSpec((1, out_pad), lambda i: (0, 0),
                         pipeline_mode=pl.Buffered(1)),                    # LN weight
            pl.BlockSpec((1, out_pad), lambda i: (0, 0),
                         pipeline_mode=pl.Buffered(1)),                    # LN bias
        ]
        out_specs = pl.BlockSpec((tm, out_pad), lambda i: (i, 0))
        scratch_shapes = []
        dim_sem = ("parallel",)
    else:
        kernel = functools.partial(_mlp_vectornet_kernel_ktiled, eps=eps,
                                   valid_out=out_features, precision=precision)
        grid = (grid_rows, hidden_pad // tk)
        in_specs = [
            pl.BlockSpec((tm, tk), lambda i, k: (i, k)),                   # x tile
            pl.BlockSpec((tk, out_pad), lambda i, k: (k, 0)),              # W^T stream
            pl.BlockSpec((1, out_pad), lambda i, k: (0, 0),
                         pipeline_mode=pl.Buffered(1)),                    # bias
            pl.BlockSpec((1, out_pad), lambda i, k: (0, 0),
                         pipeline_mode=pl.Buffered(1)),                    # LN weight
            pl.BlockSpec((1, out_pad), lambda i, k: (0, 0),
                         pipeline_mode=pl.Buffered(1)),                    # LN bias
        ]
        out_specs = pl.BlockSpec((tm, out_pad), lambda i, k: (i, 0))
        scratch_shapes = [pltpu.VMEM((tm, out_pad), jnp.float32)]
        dim_sem = ("parallel", "arbitrary")

    out2d = pl.pallas_call(
        kernel,
        out_shape=jax.ShapeDtypeStruct((n_rows, out_pad), out_dtype),
        grid_spec=pltpu.PrefetchScalarGridSpec(
            num_scalar_prefetch=0,
            grid=grid,
            in_specs=in_specs,
            out_specs=out_specs,
            scratch_shapes=scratch_shapes,
        ),
        compiler_params=pltpu.CompilerParams(
            dimension_semantics=dim_sem,
            vmem_limit_bytes=vmem_limit,
        ),
    )(x2d, w_t, b2, g2, beta2)

    if return_lane_padded:
        return out2d.reshape(*lead, out_pad)
    if out_pad != out_features:
        # Extra HBM pass; prefer return_lane_padded=True + fuse the slice into the
        # consumer when out_features % 128 != 0 and this path is hot.
        out2d = out2d[:, :out_features]
    return out2d.reshape(*lead, out_features)


def _reference(hidden_states, w, b, gamma, beta, eps=1e-5):
    h = jnp.einsum("...h,oh->...o", hidden_states, w) + b
    u = jnp.mean(h, axis=-1, keepdims=True)
    s = jnp.mean((h - u) ** 2, axis=-1, keepdims=True)
    h = (h - u) / jnp.sqrt(s + eps)
    h = gamma * h + beta
    return jnp.maximum(h, 0.0)


if __name__ == "__main__":
    key = jax.random.PRNGKey(0)
    batch, seq, hidden = 2, 8, 32
    out_features = hidden  # MLP_vectornet default: out_features = hidden_size

    kx, kw, kb = jax.random.split(key, 3)
    x = jax.random.normal(kx, (batch, seq, hidden), dtype=jnp.float32)

    # Deterministic parameter init (PyTorch Linear-style uniform bound).
    bound = 1.0 / jnp.sqrt(hidden)
    w = jax.random.uniform(kw, (out_features, hidden), jnp.float32, -bound, bound)
    b = jax.random.uniform(kb, (out_features,), jnp.float32, -bound, bound)
    gamma = jnp.ones((out_features,), jnp.float32)   # LayerNorm weight
    beta = jnp.zeros((out_features,), jnp.float32)   # LayerNorm bias

    out = mlp_vectornet(x, w, b, gamma, beta)
    out = jax.block_until_ready(out)

    ref = _reference(x, w, b, gamma, beta)
    assert out.shape == (batch, seq, out_features)
    assert jnp.allclose(out, ref, atol=1e-4, rtol=1e-4), "mismatch vs reference"
    print("KERNEL_OK")
</pallas_src>

<mosaic_0001>
module attributes {stable_mosaic.version = 11 : i64} {
  func.func @_mlp_vectornet_kernel(%arg0: i32, %arg1: memref<8x32xf32, #tpu.memory_space<vmem>>, %arg2: memref<32x128xf32, #tpu.memory_space<vmem>>, %arg3: memref<1x128xf32, #tpu.memory_space<vmem>>, %arg4: memref<1x128xf32, #tpu.memory_space<vmem>>, %arg5: memref<1x128xf32, #tpu.memory_space<vmem>>, %arg6: memref<8x128xf32, #tpu.memory_space<vmem>>) attributes {dimension_semantics = [#tpu.dimension_semantics<parallel>], iteration_bounds = array<i64: 2>, scalar_prefetch = 0 : i64, scratch_operands = 0 : i64, tpu.core_type = #tpu.core_type<tc>, window_params = [{transform_indices = @transform_0, window_bounds = array<i64: 8, 32>}, {pipeline_mode = #tpu.pipeline_mode<synchronous>, transform_indices = @transform_1, window_bounds = array<i64: 32, 128>}, {pipeline_mode = #tpu.pipeline_mode<synchronous>, transform_indices = @transform_2, window_bounds = array<i64: 1, 128>}, {pipeline_mode = #tpu.pipeline_mode<synchronous>, transform_indices = @transform_3, window_bounds = array<i64: 1, 128>}, {pipeline_mode = #tpu.pipeline_mode<synchronous>, transform_indices = @transform_4, window_bounds = array<i64: 1, 128>}, {transform_indices = @transform_5, window_bounds = array<i64: 8, 128>}]} {
    %c0 = arith.constant 0 : index
    %c0_0 = arith.constant 0 : index
    %0 = vector.load %arg1[%c0, %c0_0] : memref<8x32xf32, #tpu.memory_space<vmem>>, vector<8x32xf32>
    %c0_1 = arith.constant 0 : index
    %c0_2 = arith.constant 0 : index
    %1 = vector.load %arg2[%c0_1, %c0_2] : memref<32x128xf32, #tpu.memory_space<vmem>>, vector<32x128xf32>
    %cst = arith.constant dense<0.000000e+00> : vector<8x128xf32>
    %2 = tpu.matmul %0, %1, %cst {dimension_numbers = #tpu.dot_dimension_numbers<[1], [0], [0], [1], [0, 0, 1, 1], [], []>} : vector<8x32xf32>, vector<32x128xf32>, vector<8x128xf32> -> vector<8x128xf32>
    %c0_3 = arith.constant 0 : index
    %c0_4 = arith.constant 0 : index
    %3 = vector.load %arg3[%c0_3, %c0_4] : memref<1x128xf32, #tpu.memory_space<vmem>>, vector<1x128xf32>
    %4 = vector.broadcast %3 : vector<1x128xf32> to vector<8x128xf32>
    %5 = arith.addf %2, %4 : vector<8x128xf32>
    %cst_5 = arith.constant dense<0.000000e+00> : vector<8xf32>
    %6 = vector.multi_reduction <add>, %5, %cst_5 [1] : vector<8x128xf32> to vector<8xf32>
    %7 = vector.shape_cast %6 : vector<8xf32> to vector<8x1xf32>
    %cst_6 = arith.constant 3.125000e-02 : f32
    %8 = vector.broadcast %cst_6 : f32 to vector<8x1xf32>
    %9 = arith.mulf %7, %8 : vector<8x1xf32>
    %10 = arith.mulf %5, %5 : vector<8x128xf32>
    %cst_7 = arith.constant dense<0.000000e+00> : vector<8xf32>
    %11 = vector.multi_reduction <add>, %10, %cst_7 [1] : vector<8x128xf32> to vector<8xf32>
    %12 = vector.shape_cast %11 : vector<8xf32> to vector<8x1xf32>
    %cst_8 = arith.constant 3.125000e-02 : f32
    %13 = vector.broadcast %cst_8 : f32 to vector<8x1xf32>
    %14 = arith.mulf %12, %13 : vector<8x1xf32>
    %15 = arith.mulf %9, %9 : vector<8x1xf32>
    %16 = arith.subf %14, %15 : vector<8x1xf32>
    %cst_9 = arith.constant 0.000000e+00 : f32
    %17 = vector.broadcast %cst_9 : f32 to vector<8x1xf32>
    %18 = arith.maximumf %16, %17 : vector<8x1xf32>
    %cst_10 = arith.constant 9.99999974E-6 : f32
    %19 = vector.broadcast %cst_10 : f32 to vector<8x1xf32>
    %20 = arith.addf %18, %19 : vector<8x1xf32>
    %21 = math.rsqrt %20 : vector<8x1xf32>
    %c0_11 = arith.constant 0 : index
    %c0_12 = arith.constant 0 : index
    %22 = vector.load %arg4[%c0_11, %c0_12] : memref<1x128xf32, #tpu.memory_space<vmem>>, vector<1x128xf32>
    %23 = vector.broadcast %22 : vector<1x128xf32> to vector<8x128xf32>
    %24 = vector.broadcast %21 : vector<8x1xf32> to vector<8x128xf32>
    %25 = arith.mulf %23, %24 : vector<8x128xf32>
    %26 = vector.broadcast %9 : vector<8x1xf32> to vector<8x128xf32>
    %27 = arith.subf %5, %26 : vector<8x128xf32>
    %28 = arith.mulf %27, %25 : vector<8x128xf32>
    %c0_13 = arith.constant 0 : index
    %c0_14 = arith.constant 0 : index
    %29 = vector.load %arg5[%c0_13, %c0_14] : memref<1x128xf32, #tpu.memory_space<vmem>>, vector<1x128xf32>
    %30 = vector.broadcast %29 : vector<1x128xf32> to vector<8x128xf32>
    %31 = arith.addf %28, %30 : vector<8x128xf32>
    %cst_15 = arith.constant 0.000000e+00 : f32
    %32 = vector.broadcast %cst_15 : f32 to vector<8x128xf32>
    %33 = arith.maximumf %31, %32 : vector<8x128xf32>
    %c0_16 = arith.constant 0 : index
    %c0_17 = arith.constant 0 : index
    %34 = vector.load %arg6[%c0_16, %c0_17] : memref<8x128xf32, #tpu.memory_space<vmem>>, vector<8x128xf32>
    tpu.vector_store %arg6[%c0_16, %c0_17], %33 {strides = array<i32>} : memref<8x128xf32, #tpu.memory_space<vmem>>, vector<8x128xf32>,
    return
  }
  func.func @transform_0(%arg0: i32) -> (i32, i32) {
    %c0_i32 = arith.constant 0 : i32
    %c0_i32_0 = arith.constant 0 : i32
    return %arg0, %c0_i32 : i32, i32
  }
  func.func @transform_1(%arg0: i32) -> (i32, i32) {
    %c0_i32 = arith.constant 0 : i32
    %c0_i32_0 = arith.constant 0 : i32
    %c0_i32_1 = arith.constant 0 : i32
    return %c0_i32, %c0_i32_0 : i32, i32
  }
  func.func @transform_2(%arg0: i32) -> (i32, i32) {
    %c0_i32 = arith.constant 0 : i32
    %c0_i32_0 = arith.constant 0 : i32
    %c0_i32_1 = arith.constant 0 : i32
    return %c0_i32, %c0_i32_0 : i32, i32
  }
  func.func @transform_3(%arg0: i32) -> (i32, i32) {
    %c0_i32 = arith.constant 0 : i32
    %c0_i32_0 = arith.constant 0 : i32
    %c0_i32_1 = arith.constant 0 : i32
    return %c0_i32, %c0_i32_0 : i32, i32
  }
  func.func @transform_4(%arg0: i32) -> (i32, i32) {
    %c0_i32 = arith.constant 0 : i32
    %c0_i32_0 = arith.constant 0 : i32
    %c0_i32_1 = arith.constant 0 : i32
    return %c0_i32, %c0_i32_0 : i32, i32
  }
  func.func @transform_5(%arg0: i32) -> (i32, i32) {
    %c0_i32 = arith.constant 0 : i32
    %c0_i32_0 = arith.constant 0 : i32
    return %arg0, %c0_i32 : i32, i32
  }
}

</mosaic_0001>

<llo_original>
// kernel: tpu_custom_call.1
$region0: #{tpu_custom_call.1}
  #allocation0 [shape = 'u32[]', space=smem, size = 0x4, offset = 0x4, fixed_abs, tag = 'smem constant byte address 0x4 - core index']
  #allocation1 [shape = 'u32[144,128]{1,0:T(1,128)}', space=vmem, size = 0x12000, scoped, tag = 'internal scratch']
  %s0 = inlined_call_operand.hbm [shape: f32[16,32], index: 0, kind: input, shape index: {}]
  %s1 = inlined_call_operand.hbm [shape: f32[32,128], index: 1, kind: input, shape index: {}]
  %s2 = inlined_call_operand.vmem [shape: f32[1,128], index: 2, kind: input, shape index: {}]
  %s3 = inlined_call_operand.vmem [shape: f32[1,128], index: 3, kind: input, shape index: {}]
  %s4 = inlined_call_operand.vmem [shape: f32[1,128], index: 4, kind: input, shape index: {}]
  %s5 = inlined_call_operand.hbm [shape: f32[16,128], index: 5, kind: output, shape index: {}]
  %s6 = sld [smem:[#allocation0]]
  $region61: #{tpu_custom_call.1} parent=0
    _
  %s8 = ssub.s32 1, %s6
  %s9 = scalar_select 0, %s8, %s6
  $region1: #{tpu_custom_call.1} parent=0
    #allocation2 [shape = 'u8[8192]{0}', space=vmem, size = 0x2000, scoped, tag = 'input window, operand 0']
    #allocation3 [shape = 's32[2]{0}', space=sflag, size = 0x8, scoped, tag = 'scoped memory for tpu_custom_call.1']
    #allocation4 [shape = 's32[2]{0}', space=sflag, size = 0x8, scoped, tag = 'scoped memory for tpu_custom_call.1']
    #allocation5 [shape = 'u8[16384]{0}', space=vmem, size = 0x4000, scoped, tag = 'input window, operand 1, single buffered']
    #allocation6 [shape = 's32[1]{0}', space=sflag, size = 0x4, scoped, tag = 'scoped memory for tpu_custom_call.1']
    #allocation7 [shape = 'u8[8192]{0}', space=vmem, size = 0x2000, scoped, tag = 'output window, operand 0']
    %10 = vsyncpa [#allocation3], 0
    %s11 = scalar_lea.sflag [#allocation3], 1
    %12 = vsyncpa %s11, 0
    %13 = vsyncpa [#allocation6], 0
    %14 = vsyncpa [#allocation4], 0
    %s15 = scalar_lea.sflag [#allocation4], 1
    %16 = vsyncpa %s15, 0
    loop: start=0, step=1, limit=4
    $region2: #{tpu_custom_call.1} parent=1 // loop_pre_header
      _
    $region3: #{tpu_custom_call.1} parent=1 // loop_header
      %s18 = sphi 0, %s22
      %p19 = scmp.ge.s32.totalorder %s18, 4
      %s28 = sphi 0, %s30
      %s31 = sphi 0, %s28
      %s32 = sphi 0, %s31
      %s48 = sphi 0, %s32
      %s52 = sphi 0, %s52
      %s54 = sphi 0, %s52
      %s55 = sphi 0, %s54
      %s69 = sphi 0, %s55
      %s73 = sphi 0, %s73
      %s75 = sphi 0, %s73
      %s76 = sphi 0, %s75
      %s90 = sphi 0, %s76
      %s94 = sphi 0, %s94
      %s96 = sphi 0, %s94
      %s97 = sphi 0, %s96
      %s111 = sphi 0, %s97
      %s115 = sphi 0, %s115
      %s117 = sphi 0, %s115
      %s118 = sphi 0, %s117
      %s132 = sphi 0, %s118
      %s138 = sphi 0, %s140
      %s141 = sphi 0, %s138
      %s142 = sphi 0, %s141
      %s158 = sphi 0, %s142
    $region4: #{tpu_custom_call.1} parent=1 // loop_header_branch
      %21 = sbr.rel (%p19) target = $region8
    $region5: #{tpu_custom_call.1} parent=1 // loop_body
      %s23 = ssub.s32 %s18, 1
      %s24 = ssub.s32 %s18, 2
      %s25 = sadd.s32 %s18, 1
      %s26 = ssub.s32 %s18, %s25
      %p27 = scmp.eq.s32.totalorder %s26, 0
      %s29 = sadd.s32 %s28, 1
      %s30 = scalar_select %p27, %s28, %s29
      %p33 = pneg %p27
      %p34 = scmp.eq.s32.totalorder %s18, 1
      %p35 = por %p33, %p34
      %p36 = scmp.ne.s32.totalorder %s28, %s31
      %p37 = scmp.eq.s32.totalorder %s18, 0
      %p38 = por %p36, %p37
      %p39 = scmp.ne.s32.totalorder %s28, %s31
      %p40 = scmp.eq.s32.totalorder %s23, 1
      %p41 = por %p39, %p40
      %p42 = scmp.ne.s32.totalorder %s31, %s32
      %p43 = scmp.eq.s32.totalorder %s23, 0
      %p44 = por %p42, %p43
      %p45 = scmp.ne.s32.totalorder %s31, %s32
      %p46 = scmp.eq.s32.totalorder %s24, 1
      %p47 = por %p45, %p46
      %p49 = scmp.ne.s32.totalorder %s32, %s48
      %p50 = scmp.eq.s32.totalorder %s24, 0
      %p51 = por %p49, %p50
      %s53 = sadd.s32 %s52, 1
      %p56 = scmp.eq.s32.totalorder %s18, 1
      %p57 = scmp.ne.s32.totalorder %s52, %s54
      %p58 = scmp.eq.s32.totalorder %s18, 0
      %p59 = por %p57, %p58
      %p60 = scmp.ne.s32.totalorder %s52, %s54
      %p61 = scmp.eq.s32.totalorder %s23, 1
      %p62 = por %p60, %p61
      %p63 = scmp.ne.s32.totalorder %s54, %s55
      %p64 = scmp.eq.s32.totalorder %s23, 0
      %p65 = por %p63, %p64
      %p66 = scmp.ne.s32.totalorder %s54, %s55
      %p67 = scmp.eq.s32.totalorder %s24, 1
      %p68 = por %p66, %p67
      %p70 = scmp.ne.s32.totalorder %s55, %s69
      %p71 = scmp.eq.s32.totalorder %s24, 0
      %p72 = por %p70, %p71
      %s74 = sadd.s32 %s73, 1
      %p77 = scmp.eq.s32.totalorder %s18, 1
      %p78 = scmp.ne.s32.totalorder %s73, %s75
      %p79 = scmp.eq.s32.totalorder %s18, 0
      %p80 = por %p78, %p79
      %p81 = scmp.ne.s32.totalorder %s73, %s75
      %p82 = scmp.eq.s32.totalorder %s23, 1
      %p83 = por %p81, %p82
      %p84 = scmp.ne.s32.totalorder %s75, %s76
      %p85 = scmp.eq.s32.totalorder %s23, 0
      %p86 = por %p84, %p85
      %p87 = scmp.ne.s32.totalorder %s75, %s76
      %p88 = scmp.eq.s32.totalorder %s24, 1
      %p89 = por %p87, %p88
      %p91 = scmp.ne.s32.totalorder %s76, %s90
      %p92 = scmp.eq.s32.totalorder %s24, 0
      %p93 = por %p91, %p92
      %s95 = sadd.s32 %s94, 1
      %p98 = scmp.eq.s32.totalorder %s18, 1
      %p99 = scmp.ne.s32.totalorder %s94, %s96
      %p100 = scmp.eq.s32.totalorder %s18, 0
      %p101 = por %p99, %p100
      %p102 = scmp.ne.s32.totalorder %s94, %s96
      %p103 = scmp.eq.s32.totalorder %s23, 1
      %p104 = por %p102, %p103
      %p105 = scmp.ne.s32.totalorder %s96, %s97
      %p106 = scmp.eq.s32.totalorder %s23, 0
      %p107 = por %p105, %p106
      %p108 = scmp.ne.s32.totalorder %s96, %s97
      %p109 = scmp.eq.s32.totalorder %s24, 1
      %p110 = por %p108, %p109
      %p112 = scmp.ne.s32.totalorder %s97, %s111
      %p113 = scmp.eq.s32.totalorder %s24, 0
      %p114 = por %p112, %p113
      %s116 = sadd.s32 %s115, 1
      %p119 = scmp.eq.s32.totalorder %s18, 1
      %p120 = scmp.ne.s32.totalorder %s115, %s117
      %p121 = scmp.eq.s32.totalorder %s18, 0
      %p122 = por %p120, %p121
      %p123 = scmp.ne.s32.totalorder %s115, %s117
      %p124 = scmp.eq.s32.totalorder %s23, 1
      %p125 = por %p123, %p124
      %p126 = scmp.ne.s32.totalorder %s117, %s118
      %p127 = scmp.eq.s32.totalorder %s23, 0
      %p128 = por %p126, %p127
      %p129 = scmp.ne.s32.totalorder %s117, %s118
      %p130 = scmp.eq.s32.totalorder %s24, 1
      %p131 = por %p129, %p130
      %p133 = scmp.ne.s32.totalorder %s118, %s132
      %p134 = scmp.eq.s32.totalorder %s24, 0
      %p135 = por %p133, %p134
      %s136 = ssub.s32 %s18, %s25
      %p137 = scmp.eq.s32.totalorder %s136, 0
      %s139 = sadd.s32 %s138, 1
      %s140 = scalar_select %p137, %s138, %s139
      %p143 = pneg %p137
      %p144 = scmp.eq.s32.totalorder %s18, 1
      %p145 = por %p143, %p144
      %p146 = scmp.ne.s32.totalorder %s138, %s141
      %p147 = scmp.eq.s32.totalorder %s18, 0
      %p148 = por %p146, %p147
      %p149 = scmp.ne.s32.totalorder %s138, %s141
      %p150 = scmp.eq.s32.totalorder %s23, 1
      %p151 = por %p149, %p150
      %p152 = scmp.ne.s32.totalorder %s141, %s142
      %p153 = scmp.eq.s32.totalorder %s23, 0
      %p154 = por %p152, %p153
      %p155 = scmp.ne.s32.totalorder %s141, %s142
      %p156 = scmp.eq.s32.totalorder %s24, 1
      %p157 = por %p155, %p156
      %p159 = scmp.ne.s32.totalorder %s142, %s158
      %p160 = scmp.eq.s32.totalorder %s24, 0
      %p161 = por %p159, %p160
      %p162 = scmp.le.s32.totalorder 1, %s18
      %p163 = scmp.lt.s32.totalorder %s18, 3
      %p164 = pnand %p162, %p163
      %p165 = pneg %p164
      // Predicated region
      $region9: #{tpu_custom_call.1} parent=5 // pred_check
        _
      $region10: #{tpu_custom_call.1} parent=5 // pred_check_branch
        %167 = sbr.rel (%p164) target = $region12
      $region11: #{tpu_custom_call.1} parent=5 // pred_region
        %s168 = ssub.s32 %s18, 1
        // Predicated region
        $region13: #{tpu_custom_call.1} parent=11 // pred_check
          %p169 = pneg %p65
        $region14: #{tpu_custom_call.1} parent=11 // pred_check_branch
          %171 = sbr.rel (%p169) target = $region16
        $region15: #{tpu_custom_call.1} parent=11 // pred_region
          %s173 = ssub.s32 512, 512
          %174 = vsyncadd [#allocation6], %s173
          %s175 = sshll.u32 [#allocation5], 4
          %s176 = int_to_ptr.vmem [resolvable:$true] %s175
          %181 = dma.hbm_to_vmem [thread:$0]  %s1, 512, %s176, [#allocation6], 128, 128, 8
        $region16: #{tpu_custom_call.1} parent=11 // pred_fallthru
          _
        // Predicated region
        $region17: #{tpu_custom_call.1} parent=11 // pred_check
          %p182 = pneg %p86
        $region18: #{tpu_custom_call.1} parent=11 // pred_check_branch
          %184 = sbr.rel (%p182) target = $region20
        $region19: #{tpu_custom_call.1} parent=11 // pred_region
          _
        $region20: #{tpu_custom_call.1} parent=11 // pred_fallthru
          _
        // Predicated region
        $region21: #{tpu_custom_call.1} parent=11 // pred_check
          %p185 = pneg %p107
        $region22: #{tpu_custom_call.1} parent=11 // pred_check_branch
          %187 = sbr.rel (%p185) target = $region24
        $region23: #{tpu_custom_call.1} parent=11 // pred_region
          _
        $region24: #{tpu_custom_call.1} parent=11 // pred_fallthru
          _
        // Predicated region
        $region25: #{tpu_custom_call.1} parent=11 // pred_check
          %p188 = pneg %p128
        $region26: #{tpu_custom_call.1} parent=11 // pred_check_branch
          %190 = sbr.rel (%p188) target = $region28
        $region27: #{tpu_custom_call.1} parent=11 // pred_region
          _
        $region28: #{tpu_custom_call.1} parent=11 // pred_fallthru
          _
      $region12: #{tpu_custom_call.1} parent=5 // pred_fallthru
        _
      %p191 = scmp.lt.s32.totalorder %s18, 2
      // Predicated region
      $region29: #{tpu_custom_call.1} parent=5 // pred_check
        %p192 = pneg %p191
      $region30: #{tpu_custom_call.1} parent=5 // pred_check_branch
        %194 = sbr.rel (%p192) target = $region32
      $region31: #{tpu_custom_call.1} parent=5 // pred_region
        // Predicated region
        $region33: #{tpu_custom_call.1} parent=31 // pred_check
          %p195 = pneg %p38
        $region34: #{tpu_custom_call.1} parent=31 // pred_check_branch
          %197 = sbr.rel (%p195) target = $region36
        $region35: #{tpu_custom_call.1} parent=31 // pred_region
          %s198 = sand.u32 %s28, 1
          %s199 = scalar_lea.sflag [#allocation3], %s198
          %s200 = sand.u32 %s28, 1
          %s201 = smul.addr %s200, 8
          %s202 = scalar_lea.vmem [#allocation2], %s201
          %s204 = ssub.s32 128, 128
          %205 = vsyncadd %s199, %s204
          %s206 = smul.addr %s18, 128
          %s207 = scalar_lea.hbm %s0, %s206
          %s209 = sshll.u32 %s202, 4
          %s210 = int_to_ptr.vmem [resolvable:$true] %s209
          %212 = dma.hbm_to_vmem [thread:$0]  %s207, 128, %s210, %s199
        $region36: #{tpu_custom_call.1} parent=31 // pred_fallthru
          _
      $region32: #{tpu_custom_call.1} parent=5 // pred_fallthru
        _
      %p213 = scmp.le.s32.totalorder 1, %s18
      %p214 = scmp.lt.s32.totalorder %s18, 3
      %p215 = pnand %p213, %p214
      %p216 = pneg %p215
      // Predicated region
      $region37: #{tpu_custom_call.1} parent=5 // pred_check
        _
      $region38: #{tpu_custom_call.1} parent=5 // pred_check_branch
        %218 = sbr.rel (%p215) target = $region40
      $region39: #{tpu_custom_call.1} parent=5 // pred_region
        %s219 = ssub.s32 %s18, 1
        %s220 = sand.u32 %s31, 1
        %s221 = scalar_lea.sflag [#allocation3], %s220
        %s222 = sand.u32 %s31, 1
        %s223 = smul.addr %s222, 8
        %s224 = scalar_lea.vmem [#allocation2], %s223
        // Predicated region
        $region41: #{tpu_custom_call.1} parent=39 // pred_check
          %p225 = pneg %p44
        $region42: #{tpu_custom_call.1} parent=39 // pred_check_branch
          %227 = sbr.rel (%p225) target = $region44
        $region43: #{tpu_custom_call.1} parent=39 // pred_region
          %228 = dma.done %s221, 128
        $region44: #{tpu_custom_call.1} parent=39 // pred_fallthru
          _
        // Predicated region
        $region45: #{tpu_custom_call.1} parent=39 // pred_check
          %p229 = pneg %p65
        $region46: #{tpu_custom_call.1} parent=39 // pred_check_branch
          %231 = sbr.rel (%p229) target = $region48
        $region47: #{tpu_custom_call.1} parent=39 // pred_region
          %232 = dma.done [#allocation6], 512
        $region48: #{tpu_custom_call.1} parent=39 // pred_fallthru
          _
        %s233 = sand.u32 %s31, 1
        %s234 = scalar_lea.sflag [#allocation3], %s233
        %s235 = sand.u32 %s31, 1
        %s236 = smul.addr %s235, 8
        %s237 = scalar_lea.vmem [#allocation2], %s236
        %p238 = pneg %p44
        %p239 = pneg %p41
        %p240 = pneg %p65
        %p241 = pneg %p62
        %p242 = pneg %p86
        %p243 = pneg %p83
        %p244 = pneg %p107
        %p245 = pneg %p104
        %p246 = pneg %p128
        %p247 = pneg %p125
        %p248 = pneg %p154
        %p249 = pneg %p151
        %s250 = sand.u32 %s141, 1
        %s251 = scalar_lea.sflag [#allocation4], %s250
        %s252 = sand.u32 %s141, 1
        %s253 = smul.addr %s252, 8
        %s254 = scalar_lea.vmem [#allocation7], %s253
        %v255 = vld [vmem:[%s224] sm:$0xff]
        %v256 = vld [vmem:[#allocation5] sm:$0xff]
        %v257 = vld [vmem:[#allocation5 + $0x8] sm:$0xff]
        %v258 = vld [vmem:[#allocation5 + $0x10] sm:$0xff]
        %v259 = vld [vmem:[#allocation5 + $0x18] sm:$0xff]
        %v260 = vld [vmem:[%s2] sm:$0x1]
        %v262 = vlaneseq
        %v263 = vshrl.u32 %v262, 7
        %v264 = vsub.s32 0, %v263
        %v265 = vrot.slane %v260, %v264
        %vm267 = vcmask 261120
        %v269 = vsel %vm267, %v255, 0
        %271 = vmatprep.subr.mxu0 0.0
        %272 = vmatpush1.msra.mxu0 %v256
        %273 = vmatprep.subr.mxu0 0.0
        %274 = vmatpush1.msra.mxu0 %v257
        %275 = vmatprep.subr.mxu0 0.0
        %276 = vmatpush1.msra.mxu0 %v258
        %277 = vmatprep.subr.mxu0 0.0
        %278 = vmatpush1.msra.mxu0 %v259
        %279 = vmatprep.subr.mxu0 0.0
        %280 = vmatpush1.msra.mxu0 0.0
        %281 = vmatprep.subr.mxu0 0.0
        %282 = vmatpush1.msra.mxu0 0.0
        %283 = vmatprep.subr.mxu0 0.0
        %284 = vmatpush1.msra.mxu0 0.0
        %285 = vmatprep.subr.mxu0 0.0
        %286 = vmatpush1.msra.mxu0 0.0
        %287 = vmatprep.subr.mxu0 0.0
        %288 = vmatpush1.msra.mxu0 0.0
        %289 = vmatprep.subr.mxu0 0.0
        %290 = vmatpush1.msra.mxu0 0.0
        %291 = vmatprep.subr.mxu0 0.0
        %292 = vmatpush1.msra.mxu0 0.0
        %293 = vmatprep.subr.mxu0 0.0
        %294 = vmatpush1.msra.mxu0 0.0
        %295 = vmatprep.subr.mxu0 0.0
        %296 = vmatpush1.msra.mxu0 0.0
        %297 = vmatprep.subr.mxu0 0.0
        %298 = vmatpush1.msra.mxu0 0.0
        %299 = vmatprep.subr.mxu0 0.0
        %300 = vmatpush1.msra.mxu0 0.0
        %301 = vmatprep.subr.mxu0 0.0
        %302 = vmatpush1.msra.mxu0 0.0
        %303 = vmatprep.subr.mxu0 0.0
        %304 = vmatpush1.msra.mxu0 0.0
        %305 = vmatprep.subr.mxu0 0.0
        %306 = vmatpush1.msra.mxu0 0.0
        %307 = vmatprep.subr.mxu0 0.0
        %308 = vmatpush1.msra.mxu0 0.0
        %309 = vmatprep.subr.mxu0 0.0
        %310 = vmatpush1.msra.mxu0 0.0
        %311 = vmatprep.subr.mxu0 0.0
        %312 = vmatpush1.msra.mxu0 0.0
        %313 = vmatprep.subr.mxu0 0.0
        %314 = vmatpush1.msra.mxu0 0.0
        %315 = vmatprep.subr.mxu0 0.0
        %316 = vmatpush1.msra.mxu0 0.0
        %317 = vmatprep.subr.mxu0 0.0
        %318 = vmatpush1.msra.mxu0 0.0
        %319 = vmatprep.subr.mxu0 0.0
        %320 = vmatpush1.msra.mxu0 0.0
        %321 = vmatprep.subr.mxu0 0.0
        %322 = vmatpush1.msra.mxu0 0.0
        %323 = vmatprep.subr.mxu0 0.0
        %324 = vmatpush1.msra.mxu0 0.0
        %325 = vmatprep.subr.mxu0 0.0
        %326 = vmatpush1.msra.mxu0 0.0
        %327 = vmatprep.subr.mxu0 0.0
        %328 = vmatpush1.msra.mxu0 0.0
        %329 = vmatprep.subr.mxu0 0.0
        %330 = vmatpush1.msra.mxu0 0.0
        %331 = vmatprep.subr.mxu0 0.0
        %332 = vmatpush1.msra.mxu0 0.0
        %333 = vmatprep.subr.mxu0 0.0
        %334 = vmatpush1.msra.mxu0 0.0
        %335 = vmatprep.mubr.f32.mxu0 0.0
        %336 = vmatmul.mubr.f32.gmra.mrb[0].mxu0 %v269
        %v337 = vpop.f32.mrb[0].mxu0
        %v338 = vadd.f32 %v265, %v337
        %v339 = vpop.f32.mrb[0].mxu0
        %340 = vdwg.mxu0
        %341 = vadd.xlane.f32.xlu0 %v338
        %v342 = vpop.xlane.xlu0 %341
        %v343 = vmul.f32 %v342, 0.03125
        %v344 = vmul.f32 %v338, %v338
        %345 = vadd.xlane.f32.xlu0 %v344
        %v346 = vpop.xlane.xlu0 %345
        %v347 = vmul.f32 %v346, 0.03125
        %v348 = vmul.f32 %v343, %v343
        %v349 = vsub.f32 %v347, %v348
        %v350 = vmax.f32 %v349, 0.0
        %v351 = vadd.f32 %v350, 1e-05
        %v352 = vrsqrt.pop %v351
        %v353 = vld [vmem:[%s3] sm:$0x1]
        %v355 = vlaneseq
        %v356 = vshrl.u32 %v355, 7
        %v357 = vsub.s32 0, %v356
        %v358 = vrot.slane %v353, %v357
        %v360 = vmul.f32 %v358, %v352
        %v361 = vsub.f32 %v338, %v343
        %v362 = vmul.f32 %v361, %v360
        %v363 = vld [vmem:[%s4] sm:$0x1]
        %v365 = vlaneseq
        %v366 = vshrl.u32 %v365, 7
        %v367 = vsub.s32 0, %v366
        %v368 = vrot.slane %v363, %v367
        %v370 = vadd.f32 %v362, %v368
        %v371 = vmax.f32 %v370, 0.0
        %372 = vst [vmem:[%s254] sm:$0xff] %v371
        %s373 = sand.u32 %s141, 1
        %s374 = scalar_lea.sflag [#allocation4], %s373
        %s375 = sand.u32 %s141, 1
        %s376 = smul.addr %s375, 8
        %s377 = scalar_lea.vmem [#allocation7], %s376
        // Predicated region
        $region49: #{tpu_custom_call.1} parent=39 // pred_check
          %p378 = pneg %p151
        $region50: #{tpu_custom_call.1} parent=39 // pred_check_branch
          %380 = sbr.rel (%p378) target = $region52
        $region51: #{tpu_custom_call.1} parent=39 // pred_region
          %s382 = ssub.s32 128, 128
          %383 = vsyncadd %s374, %s382
          %s384 = smul.addr %s23, 128
          %s385 = scalar_lea.hbm %s5, %s384
          %s387 = sshll.u32 %s377, 4
          %s388 = int_to_ptr.vmem [resolvable:$true] %s387
          %390 = dma.vmem_to_hbm [thread:$0]  %s388, 128, %s385, %s374
        $region52: #{tpu_custom_call.1} parent=39 // pred_fallthru
          _
      $region40: #{tpu_custom_call.1} parent=5 // pred_fallthru
        _
      %p391 = scmp.le.s32.totalorder 2, %s18
      // Predicated region
      $region53: #{tpu_custom_call.1} parent=5 // pred_check
        %p392 = pneg %p391
      $region54: #{tpu_custom_call.1} parent=5 // pred_check_branch
        %394 = sbr.rel (%p392) target = $region56
      $region55: #{tpu_custom_call.1} parent=5 // pred_region
        %s395 = ssub.s32 %s18, 2
        // Predicated region
        $region57: #{tpu_custom_call.1} parent=55 // pred_check
          %p396 = pneg %p157
        $region58: #{tpu_custom_call.1} parent=55 // pred_check_branch
          %398 = sbr.rel (%p396) target = $region60
        $region59: #{tpu_custom_call.1} parent=55 // pred_region
          %s399 = sand.u32 %s142, 1
          %s400 = scalar_lea.sflag [#allocation4], %s399
          %s401 = sand.u32 %s142, 1
          %s402 = smul.addr %s401, 8
          %s403 = scalar_lea.vmem [#allocation7], %s402
          %404 = dma.done %s400, 128
        $region60: #{tpu_custom_call.1} parent=55 // pred_fallthru
          _
      $region56: #{tpu_custom_call.1} parent=5 // pred_fallthru
        _
    $region6: #{tpu_custom_call.1} parent=1 // loop_footer
      %s22 = sadd.s32 1, %s18
    $region7: #{tpu_custom_call.1} parent=1 // loop_footer_branch
      %17 = sbr.rel target = $region3
    $region8: #{tpu_custom_call.1} parent=1 // loop_exit
      _
    %405 = vsyncpa [#allocation3], 1
    %s406 = scalar_lea.sflag [#allocation3], 1
    %407 = vsyncpa %s406, 1
    %408 = vsyncpa [#allocation6], 1
    %409 = vsyncpa [#allocation4], 1
    %s410 = scalar_lea.sflag [#allocation4], 1
    %411 = vsyncpa %s410, 1

</llo_original>
